<compile_context>
chip_gen: v7x
topology: tpu7x:2x2x1
jax: 0.10.0
libtpu: 0.0.40
codegen_flags: <defaults>
</compile_context>

<pallas_src>
import jax
import jax.numpy as jnp
from jax.experimental import pallas as pl
from jax.experimental.pallas import tpu as pltpu


def _head_kernel_c1(x_ref, w_ref, b_ref, o_ref):
    # x_ref: (TB, E), w_ref: (1, E), b_ref: (1, 1), o_ref: (1, TB)  (lane-dense)
    x = x_ref[...].astype(jnp.float32)
    w = w_ref[...].astype(jnp.float32)
    # VPU multiply + lane reduction: avoids a <0.5%-utilization (E,1) MXU matmul.
    logits = jnp.sum(x * w, axis=-1, keepdims=True)          # (TB, 1) f32
    # Transpose to a lane-dense (1, TB) slab so the store is an unmasked vst.
    o_ref[...] = (jnp.transpose(logits) + b_ref[...].astype(jnp.float32)).astype(
        o_ref.dtype
    )


def _head_kernel_mc(x_ref, w_ref, b_ref, o_ref):
    # x_ref: (TB, E), w_ref: (E, C), b_ref: (1, C), o_ref: (TB, C)
    logits = jnp.dot(
        x_ref[...], w_ref[...], preferred_element_type=jnp.float32
    )
    o_ref[...] = (logits + b_ref[...].astype(jnp.float32)).astype(o_ref.dtype)


def classification_head(x, w, b, num_classes, *, block_b=512):
    """x: (B, S, E); w: (E, C); b: (C,). Returns (B, C), or (B,) if C == 1."""
    B, S, E = x.shape
    C = w.shape[1]
    assert C == num_classes

    # Last-token select in the wrapper: only B*E elements are ever DMA'd.
    x_last = x[:, -1, :]                                      # (B, E)

    # Dropout: identity in inference mode (PyTorch eval semantics).
    # TODO(synk): train-mode dropout would use pltpu.prng_seed / stateful_bernoulli.

    # Batch tile: large enough to pipeline (512-1024 rows hit 85%+ of HBM
    # roofline), small enough that 2 double-buffered (TB, E) f32 tiles fit
    # v7x's 64 MiB VMEM. Clamped to B for small batches.
    tb = min(block_b, B)
    grid = (pl.cdiv(B, tb),)
    cparams = pltpu.CompilerParams(
        dimension_semantics=("parallel",)  # shard batch across v7x's 2 TCs
    )

    if C == 1:
        w_row = w.reshape(1, E)
        b2 = b.reshape(1, 1)
        out = pl.pallas_call(
            _head_kernel_c1,
            out_shape=jax.ShapeDtypeStruct((1, B), x.dtype),
            grid=grid,
            in_specs=[
                pl.BlockSpec((tb, E), lambda i: (i, 0)),
                pl.BlockSpec((1, E), lambda i: (0, 0)),   # VMEM-resident weight
                pl.BlockSpec((1, 1), lambda i: (0, 0)),   # VMEM-resident bias
            ],
            out_specs=pl.BlockSpec((1, tb), lambda i: (0, i)),  # lane-dense out
            compiler_params=cparams,
        )(x_last, w_row, b2)
        return out[0]                                      # (B,)  == squeeze(-1)
    else:
        b2 = b.reshape(1, C)
        out = pl.pallas_call(
            _head_kernel_mc,
            out_shape=jax.ShapeDtypeStruct((B, C), x.dtype),
            grid=grid,
            in_specs=[
                pl.BlockSpec((tb, E), lambda i: (i, 0)),
                pl.BlockSpec((E, C), lambda i: (0, 0)),   # VMEM-resident weight
                pl.BlockSpec((1, C), lambda i: (0, 0)),   # VMEM-resident bias
            ],
            out_specs=pl.BlockSpec((tb, C), lambda i: (i, 0)),
            compiler_params=cparams,
        )(x_last, w, b2)
        return out


if __name__ == "__main__":
    # Small shapes consistent with the module: batch=2, seq=8, embed_dim=32.
    B, S, E = 2, 8, 32
    key = jax.random.PRNGKey(0)
    kx, kw1, kb1, kw2, kb2 = jax.random.split(key, 5)

    x = jax.random.normal(kx, (B, S, E), dtype=jnp.float32)
    bound = 1.0 / (E ** 0.5)  # deterministic nn.Linear-style init

    # --- num_classes == 1 (VPU-reduction path, exercises the squeeze(-1)) ---
    C1 = 1
    w1 = jax.random.uniform(kw1, (E, C1), jnp.float32, -bound, bound)
    b1 = jax.random.uniform(kb1, (C1,), jnp.float32, -bound, bound)
    out1 = jax.block_until_ready(classification_head(x, w1, b1, C1))
    ref1 = (x[:, -1, :] @ w1 + b1).squeeze(-1)
    assert out1.shape == ref1.shape
    assert jnp.allclose(out1, ref1, atol=1e-5, rtol=1e-5)

    # --- num_classes > 1 (MXU matmul path) ---
    C2 = 4
    w2 = jax.random.uniform(kw2, (E, C2), jnp.float32, -bound, bound)
    b2 = jax.random.uniform(kb2, (C2,), jnp.float32, -bound, bound)
    out2 = jax.block_until_ready(classification_head(x, w2, b2, C2))
    ref2 = x[:, -1, :] @ w2 + b2
    assert out2.shape == ref2.shape
    assert jnp.allclose(out2, ref2, atol=1e-5, rtol=1e-5)

    print("KERNEL_OK")
</pallas_src>

<mosaic_0001>
module attributes {stable_mosaic.version = 11 : i64} {
  func.func @_head_kernel_c1(%arg0: i32, %arg1: memref<2x32xf32, #tpu.memory_space<vmem>>, %arg2: memref<1x32xf32, #tpu.memory_space<vmem>>, %arg3: memref<1x1xf32, #tpu.memory_space<vmem>>, %arg4: memref<1x2xf32, #tpu.memory_space<vmem>>) attributes {dimension_semantics = [#tpu.dimension_semantics<parallel>], iteration_bounds = array<i64: 1>, scalar_prefetch = 0 : i64, scratch_operands = 0 : i64, tpu.core_type = #tpu.core_type<tc>, window_params = [{transform_indices = @transform_0, window_bounds = array<i64: 2, 32>}, {pipeline_mode = #tpu.pipeline_mode<synchronous>, transform_indices = @transform_1, window_bounds = array<i64: 1, 32>}, {pipeline_mode = #tpu.pipeline_mode<synchronous>, transform_indices = @transform_2, window_bounds = array<i64: 1, 1>}, {transform_indices = @transform_3, window_bounds = array<i64: 1, 2>}]} {
    %c0 = arith.constant 0 : index
    %c0_0 = arith.constant 0 : index
    %0 = vector.load %arg1[%c0, %c0_0] : memref<2x32xf32, #tpu.memory_space<vmem>>, vector<2x32xf32>
    %c0_1 = arith.constant 0 : index
    %c0_2 = arith.constant 0 : index
    %1 = vector.load %arg2[%c0_1, %c0_2] : memref<1x32xf32, #tpu.memory_space<vmem>>, vector<1x32xf32>
    %2 = vector.broadcast %1 : vector<1x32xf32> to vector<2x32xf32>
    %3 = arith.mulf %0, %2 : vector<2x32xf32>
    %cst = arith.constant dense<0.000000e+00> : vector<2xf32>
    %4 = vector.multi_reduction <add>, %3, %cst [1] : vector<2x32xf32> to vector<2xf32>
    %5 = vector.shape_cast %4 : vector<2xf32> to vector<2x1xf32>
    %6 = tpu.transpose %5, [1, 0] : vector<2x1xf32> -> vector<1x2xf32>
    %c0_3 = arith.constant 0 : index
    %c0_4 = arith.constant 0 : index
    %7 = vector.load %arg3[%c0_3, %c0_4] : memref<1x1xf32, #tpu.memory_space<vmem>>, vector<1x1xf32>
    %8 = vector.broadcast %7 : vector<1x1xf32> to vector<1x2xf32>
    %9 = arith.addf %6, %8 : vector<1x2xf32>
    %c0_5 = arith.constant 0 : index
    %c0_6 = arith.constant 0 : index
    %10 = vector.load %arg4[%c0_5, %c0_6] : memref<1x2xf32, #tpu.memory_space<vmem>>, vector<1x2xf32>
    tpu.vector_store %arg4[%c0_5, %c0_6], %9 {strides = array<i32>} : memref<1x2xf32, #tpu.memory_space<vmem>>, vector<1x2xf32>,
    return
  }
  func.func @transform_0(%arg0: i32) -> (i32, i32) {
    %c0_i32 = arith.constant 0 : i32
    %c0_i32_0 = arith.constant 0 : i32
    return %arg0, %c0_i32 : i32, i32
  }
  func.func @transform_1(%arg0: i32) -> (i32, i32) {
    %c0_i32 = arith.constant 0 : i32
    %c0_i32_0 = arith.constant 0 : i32
    %c0_i32_1 = arith.constant 0 : i32
    return %c0_i32, %c0_i32_0 : i32, i32
  }
  func.func @transform_2(%arg0: i32) -> (i32, i32) {
    %c0_i32 = arith.constant 0 : i32
    %c0_i32_0 = arith.constant 0 : i32
    %c0_i32_1 = arith.constant 0 : i32
    return %c0_i32, %c0_i32_0 : i32, i32
  }
  func.func @transform_3(%arg0: i32) -> (i32, i32) {
    %c0_i32 = arith.constant 0 : i32
    %c0_i32_0 = arith.constant 0 : i32
    return %c0_i32, %arg0 : i32, i32
  }
}

</mosaic_0001>

<llo_original>
// kernel: tpu_custom_call.1
$region0: #{tpu_custom_call.1}
  #allocation0 [shape = 'u32[]', space=smem, size = 0x4, offset = 0x4, fixed_abs, tag = 'smem constant byte address 0x4 - core index']
  #allocation1 [shape = 'u32[144,128]{1,0:T(1,128)}', space=vmem, size = 0x12000, scoped, tag = 'internal scratch']
  #allocation2 [shape = 'f32[1,1]{1,0:T(1,128)S(1)}', space=vmem, size = 0x200, scoped, tag = 'scoped memory for tpu_custom_call.1']
  %s0 = inlined_call_operand.vmem [shape: f32[2,32], index: 0, kind: input, shape index: {}]
  %s1 = inlined_call_operand.vmem [shape: f32[1,32], index: 1, kind: input, shape index: {}]
  %s2 = inlined_call_operand.<no memory space> [shape: f32[1,1], index: 2, kind: input, shape index: {}]
  %s3 = inlined_call_operand.hbm [shape: f32[1,2], index: 3, kind: output, shape index: {}]
  %s4 = sld [smem:[#allocation0]]
  $region22: #{tpu_custom_call.1} parent=0
    _
  %s6 = ssub.s32 1, %s4
  %s7 = scalar_select 0, %s6, %s4
  %v8 = vstv %s2
  %9 = vst [vmem:[#allocation2] sm:$0x1] %v8
  $region1: #{tpu_custom_call.1} parent=0
    #allocation3 [shape = 'u8[512]{0}', space=vmem, size = 0x400, scoped, tag = 'output window, operand 0, single buffered']
    #allocation4 [shape = 's32[1]{0}', space=sflag, size = 0x4, scoped, tag = 'scoped memory for tpu_custom_call.1']
    %10 = vsyncpa [#allocation4], 0
    // Predicated region
    $region2: #{tpu_custom_call.1} parent=1 // pred_check
      _
    $region3: #{tpu_custom_call.1} parent=1 // pred_check_branch
      %12 = sbr.rel (0) target = $region5
    $region4: #{tpu_custom_call.1} parent=1 // pred_region
      _
    $region5: #{tpu_custom_call.1} parent=1 // pred_fallthru
      _
    // Predicated region
    $region6: #{tpu_custom_call.1} parent=1 // pred_check
      _
    $region7: #{tpu_custom_call.1} parent=1 // pred_check_branch
      %14 = sbr.rel (0) target = $region9
    $region8: #{tpu_custom_call.1} parent=1 // pred_region
      _
    $region9: #{tpu_custom_call.1} parent=1 // pred_fallthru
      _
    // Predicated region
    $region10: #{tpu_custom_call.1} parent=1 // pred_check
      _
    $region11: #{tpu_custom_call.1} parent=1 // pred_check_branch
      %16 = sbr.rel (0) target = $region13
    $region12: #{tpu_custom_call.1} parent=1 // pred_region
      _
    $region13: #{tpu_custom_call.1} parent=1 // pred_fallthru
      _
    %v17 = vld [vmem:[%s0] sm:$0x3]
    %v18 = vld [vmem:[%s1] sm:$0x1]
    %v20 = vlaneseq
    %v21 = vshrl.u32 %v20, 7
    %v22 = vsub.s32 0, %v21
    %v23 = vrot.slane %v18, %v22
    %v25 = vmul.f32 %v17, %v23
    %vm26 = vcmask 254976
    %v27 = vsel %vm26, %v25, 0.0
    %28 = vadd.xlane.f32.xlu0 %v27
    %v29 = vpop.xlane.xlu0 %28
    %30 = vxpose.xlu0.b32.start [1/16] %v29, 128
    %31 = vxpose.xlu0.b32.cont [2/16] 0.0, 128
    %32 = vxpose.xlu0.b32.cont [3/16] 0.0, 128
    %33 = vxpose.xlu0.b32.cont [4/16] 0.0, 128
    %34 = vxpose.xlu0.b32.cont [5/16] 0.0, 128
    %35 = vxpose.xlu0.b32.cont [6/16] 0.0, 128
    %36 = vxpose.xlu0.b32.cont [7/16] 0.0, 128
    %37 = vxpose.xlu0.b32.cont [8/16] 0.0, 128
    %38 = vxpose.xlu0.b32.cont [9/16] 0.0, 128
    %39 = vxpose.xlu0.b32.cont [10/16] 0.0, 128
    %40 = vxpose.xlu0.b32.cont [11/16] 0.0, 128
    %41 = vxpose.xlu0.b32.cont [12/16] 0.0, 128
    %42 = vxpose.xlu0.b32.cont [13/16] 0.0, 128
    %43 = vxpose.xlu0.b32.cont [14/16] 0.0, 128
    %44 = vxpose.xlu0.b32.cont [15/16] 0.0, 128
    %45 = vxpose.xlu0.b32.end [16/16] 0.0, 128
    %v46 = vpop.trf.xlu0
    %v47 = vpop.trf.xlu0
    %v48 = vpop.trf.xlu0
    %v49 = vpop.trf.xlu0
    %v50 = vpop.trf.xlu0
    %v51 = vpop.trf.xlu0
    %v52 = vpop.trf.xlu0
    %v53 = vpop.trf.xlu0
    %v54 = vpop.trf.xlu0
    %v55 = vpop.trf.xlu0
    %v56 = vpop.trf.xlu0
    %v57 = vpop.trf.xlu0
    %v58 = vpop.trf.xlu0
    %v59 = vpop.trf.xlu0
    %v60 = vpop.trf.xlu0
    %v61 = vpop.trf.xlu0
    %v62 = vld [vmem:[#allocation2] sm:$0x1]
    %64 = vset.pattern.permute.xlu0 0
    %65 = vperm.xlu0 %64, %v62
    %v66 = vpop.permute.xlu0 %65
    %v68 = vlaneseq
    %v69 = vshrl.u32 %v68, 7
    %v70 = vsub.s32 0, %v69
    %v71 = vrot.slane %v66, %v70
    %v72 = vadd.f32 %v46, %v71
    %vm73 = vcmask 8192
    %74 = vst.msk [vmem:[#allocation3] sm:$0x1] %vm73, %v72
    // Predicated region
    $region14: #{tpu_custom_call.1} parent=1 // pred_check
      _
    $region15: #{tpu_custom_call.1} parent=1 // pred_check_branch
      %76 = sbr.rel (0) target = $region17
    $region16: #{tpu_custom_call.1} parent=1 // pred_region
      %s78 = ssub.s32 16, 16
      %79 = vsyncadd [#allocation4], %s78
      %s81 = sshll.u32 [#allocation3], 4
      %s82 = int_to_ptr.vmem [resolvable:$true] %s81
      %84 = dma.vmem_to_hbm [thread:$0]  %s82, 16, %s3, [#allocation4]
    $region17: #{tpu_custom_call.1} parent=1 // pred_fallthru
      _
    // Predicated region
    $region18: #{tpu_custom_call.1} parent=1 // pred_check
      _
    $region19: #{tpu_custom_call.1} parent=1 // pred_check_branch
      %86 = sbr.rel (0) target = $region21
    $region20: #{tpu_custom_call.1} parent=1 // pred_region
      %87 = dma.done [#allocation4], 16
    $region21: #{tpu_custom_call.1} parent=1 // pred_fallthru
      _
    %88 = vsyncpa [#allocation4], 1

</llo_original>
